<compile_context>
chip_gen: v7x
topology: tpu7x:2x2x1
jax: 0.10.0
libtpu: 0.0.40
codegen_flags: <defaults>
</compile_context>

<pallas_src>
import jax
import jax.numpy as jnp
from jax.experimental import pallas as pl
from jax.experimental.pallas import tpu as pltpu

LANES = 128
_MIB = 1024 * 1024
_MIN_TILE_BYTES = 1 * _MIB       # per-array tile floor (HBM roofline sweet spot)
_TARGET_STEPS = 8                # aim for >=4 grid steps per TensorCore on v7x
_MAX_PIPE_BUDGET = 28 * _MIB     # double-buffered footprint cap (fits v7x 64 MiB VMEM)


def _sublanes(dtype):
    """Packed sublane granularity: 8 for 32-bit, 16 for 16-bit, 32 for 8-bit."""
    bits = jnp.dtype(dtype).itemsize * 8
    return max(8, 256 // bits)


def _vmem_capacity_bytes():
    try:
        info = pltpu.get_tpu_info()
        cap = getattr(info, "vmem_capacity_bytes", None)
        if cap:
            return int(cap)
    except Exception:
        pass
    return 64 * _MIB  # conservative fallback (v7x per-TC VMEM)


def _make_unweighted_kernel(n):
    def kernel(*refs):
        x_refs = refs[:n]
        o_ref = refs[n]
        acc = x_refs[0][...].astype(jnp.float32)
        for i in range(1, n):                 # n is static -> unrolled
            acc = acc + x_refs[i][...].astype(jnp.float32)
        o_ref[...] = acc.astype(o_ref.dtype)

    return kernel


def _make_weighted_kernel(n):
    def kernel(w_ref, *refs):
        # w_ref: scalar-prefetched SMEM (n-1,) float32, already sigmoid(w)*2
        x_refs = refs[:n]
        o_ref = refs[n]
        acc = x_refs[0][...].astype(jnp.float32)      # weight of x[0] is 1.0
        for i in range(1, n):                 # n is static -> unrolled
            acc = acc + x_refs[i][...].astype(jnp.float32) * w_ref[i - 1]
        o_ref[...] = acc.astype(o_ref.dtype)

    return kernel


def _choose_layout(total, dtype, n_tensors):
    """Pick (lane_w, rows, tile_rows, ragged, vmem_limit) for a lane-dense slab."""
    itemsize = jnp.dtype(dtype).itemsize
    sub = _sublanes(dtype)

    # Lane width: widest multiple of 128 that divides `total` exactly (no pad),
    # preferring one that still leaves >= `sub` rows so vregs stay sublane-dense.
    divisors = [c for c in (2048, 1024, 512, 256, 128) if total % c == 0]
    if divisors:
        dense = [c for c in divisors if total // c >= sub]
        lane_w = dense[0] if dense else divisors[-1]
        ragged = False
    else:
        lane_w = LANES          # rare: pad by < 128 elements in the wrapper
        ragged = True
    rows = pl.cdiv(total, lane_w)

    # Generation-aware VMEM budget for the double-buffered pipeline.
    vmem_cap = _vmem_capacity_bytes()
    budget = min(vmem_cap // 3, _MAX_PIPE_BUDGET)

    row_bytes = lane_w * itemsize
    per_row_footprint = 2 * (n_tensors + 1) * row_bytes   # 2 bufs * (n in + 1 out)
    max_rows = max(sub, budget // per_row_footprint)      # hard cap (VMEM budget)
    min_rows = max(sub, _MIN_TILE_BYTES // row_bytes)     # keep tiles ~1 MiB+
    want_rows = pl.cdiv(rows, _TARGET_STEPS)              # keep the grid busy

    tile_rows = min(max_rows, max(min_rows, want_rows))
    tile_rows = max(sub, (tile_rows // sub) * sub)        # packed-sublane multiple
    if tile_rows >= rows:
        tile_rows = rows       # single block equal to the full first dim (allowed)

    footprint = 2 * (n_tensors + 1) * tile_rows * lane_w * itemsize
    vmem_limit = int(min(vmem_cap * 3 // 4,
                         max(32 * _MIB, footprint + 16 * _MIB)))
    return lane_w, rows, tile_rows, ragged, vmem_limit


def sum_forward(xs, w_param=None):
    """xs: list of n equally-shaped arrays (e.g. NCHW). w_param: (n-1,) or None."""
    n = len(xs)
    shape = xs[0].shape
    dtype = xs[0].dtype
    total = int(xs[0].size)

    if n == 1:
        return xs[0]

    lane_w, rows, tile_rows, ragged, vmem_limit = _choose_layout(total, dtype, n)

    def to_slab(x):
        flat = x.reshape(-1)                       # free for contiguous arrays
        if ragged:
            # Only when total % 128 != 0: pad by < lane_w elements (one copy).
            flat = jnp.pad(flat, (0, rows * lane_w - total))
        return flat.reshape(rows, lane_w)

    slabs = [to_slab(x) for x in xs]
    grid = (pl.cdiv(rows, tile_rows),)             # partial last block is masked

    compiler_params = pltpu.CompilerParams(
        dimension_semantics=("parallel",),
        vmem_limit_bytes=vmem_limit,
    )
    out_shape = jax.ShapeDtypeStruct((rows, lane_w), dtype)

    if w_param is not None:
        w_eff = jax.nn.sigmoid(w_param.astype(jnp.float32)) * 2.0   # (n-1,)
        kernel = _make_weighted_kernel(n)
        tile_spec = pl.BlockSpec((tile_rows, lane_w), lambda i, w: (i, 0))
        out = pl.pallas_call(
            kernel,
            out_shape=out_shape,
            grid_spec=pltpu.PrefetchScalarGridSpec(
                num_scalar_prefetch=1,             # w_eff staged to SMEM once
                grid=grid,
                in_specs=[tile_spec] * n,
                out_specs=tile_spec,
            ),
            compiler_params=compiler_params,
        )(w_eff, *slabs)
    else:
        kernel = _make_unweighted_kernel(n)
        tile_spec = pl.BlockSpec((tile_rows, lane_w), lambda i: (i, 0))
        out = pl.pallas_call(
            kernel,
            out_shape=out_shape,
            grid_spec=pltpu.PrefetchScalarGridSpec(
                num_scalar_prefetch=0,
                grid=grid,
                in_specs=[tile_spec] * n,
                out_specs=tile_spec,
            ),
            compiler_params=compiler_params,
        )(*slabs)

    if ragged:
        return out.reshape(-1)[:total].reshape(shape)
    return out.reshape(shape)


if __name__ == "__main__":
    key = jax.random.PRNGKey(0)
    n = 3
    B, C, H, W = 2, 4, 16, 16

    keys = jax.random.split(key, n)
    xs = [jax.random.normal(k, (B, C, H, W), dtype=jnp.float32) for k in keys]

    # Deterministic parameter init matching nn.Parameter(-arange(1, n)/2)
    w_param = -jnp.arange(1.0, float(n), dtype=jnp.float32) / 2.0

    # Weighted case (weight=True)
    y_w = jax.block_until_ready(sum_forward(xs, w_param))
    w_eff = jax.nn.sigmoid(w_param) * 2.0
    ref_w = xs[0] + xs[1] * w_eff[0] + xs[2] * w_eff[1]
    assert jnp.allclose(y_w, ref_w, atol=1e-5, rtol=1e-5)

    # Unweighted case (weight=False)
    y_u = jax.block_until_ready(sum_forward(xs, None))
    ref_u = xs[0] + xs[1] + xs[2]
    assert jnp.allclose(y_u, ref_u, atol=1e-5, rtol=1e-5)

    # Ragged size (total not a multiple of 128) exercises the small-pad fallback.
    xs_r = [jax.random.normal(k, (2, 3, 10, 10), dtype=jnp.float32) for k in keys]
    y_r = jax.block_until_ready(sum_forward(xs_r, None))
    assert jnp.allclose(y_r, xs_r[0] + xs_r[1] + xs_r[2], atol=1e-5, rtol=1e-5)

    print("KERNEL_OK")
</pallas_src>

<mosaic_0001>
module attributes {stable_mosaic.version = 11 : i64} {
  func.func @kernel(%arg0: i32, %arg1: memref<2xf32, #tpu.memory_space<smem>>, %arg2: memref<8x256xf32, #tpu.memory_space<vmem>>, %arg3: memref<8x256xf32, #tpu.memory_space<vmem>>, %arg4: memref<8x256xf32, #tpu.memory_space<vmem>>, %arg5: memref<8x256xf32, #tpu.memory_space<vmem>>) attributes {dimension_semantics = [#tpu.dimension_semantics<parallel>], iteration_bounds = array<i64: 1>, scalar_prefetch = 1 : i64, scratch_operands = 0 : i64, tpu.core_type = #tpu.core_type<tc>, window_params = [{transform_indices = @transform_0, window_bounds = array<i64: 8, 256>}, {transform_indices = @transform_1, window_bounds = array<i64: 8, 256>}, {transform_indices = @transform_2, window_bounds = array<i64: 8, 256>}, {transform_indices = @transform_3, window_bounds = array<i64: 8, 256>}]} {
    %c0 = arith.constant 0 : index
    %c0_0 = arith.constant 0 : index
    %0 = vector.load %arg2[%c0, %c0_0] : memref<8x256xf32, #tpu.memory_space<vmem>>, vector<8x256xf32>
    %c0_1 = arith.constant 0 : index
    %c0_2 = arith.constant 0 : index
    %1 = vector.load %arg3[%c0_1, %c0_2] : memref<8x256xf32, #tpu.memory_space<vmem>>, vector<8x256xf32>
    %c0_3 = arith.constant 0 : index
    %2 = memref.load %arg1[%c0_3] : memref<2xf32, #tpu.memory_space<smem>>
    %3 = vector.broadcast %2 : f32 to vector<8x256xf32>
    %4 = arith.mulf %1, %3 : vector<8x256xf32>
    %5 = arith.addf %0, %4 : vector<8x256xf32>
    %c0_4 = arith.constant 0 : index
    %c0_5 = arith.constant 0 : index
    %6 = vector.load %arg4[%c0_4, %c0_5] : memref<8x256xf32, #tpu.memory_space<vmem>>, vector<8x256xf32>
    %c1 = arith.constant 1 : index
    %7 = memref.load %arg1[%c1] : memref<2xf32, #tpu.memory_space<smem>>
    %8 = vector.broadcast %7 : f32 to vector<8x256xf32>
    %9 = arith.mulf %6, %8 : vector<8x256xf32>
    %10 = arith.addf %5, %9 : vector<8x256xf32>
    %c0_6 = arith.constant 0 : index
    %c0_7 = arith.constant 0 : index
    %11 = vector.load %arg5[%c0_6, %c0_7] : memref<8x256xf32, #tpu.memory_space<vmem>>, vector<8x256xf32>
    tpu.vector_store %arg5[%c0_6, %c0_7], %10 {strides = array<i32>} : memref<8x256xf32, #tpu.memory_space<vmem>>, vector<8x256xf32>,
    return
  }
  func.func @transform_0(%arg0: i32, %arg1: memref<2xf32, #tpu.memory_space<smem>>) -> (i32, i32) {
    %c0_i32 = arith.constant 0 : i32
    %c0_i32_0 = arith.constant 0 : i32
    return %arg0, %c0_i32 : i32, i32
  }
  func.func @transform_1(%arg0: i32, %arg1: memref<2xf32, #tpu.memory_space<smem>>) -> (i32, i32) {
    %c0_i32 = arith.constant 0 : i32
    %c0_i32_0 = arith.constant 0 : i32
    return %arg0, %c0_i32 : i32, i32
  }
  func.func @transform_2(%arg0: i32, %arg1: memref<2xf32, #tpu.memory_space<smem>>) -> (i32, i32) {
    %c0_i32 = arith.constant 0 : i32
    %c0_i32_0 = arith.constant 0 : i32
    return %arg0, %c0_i32 : i32, i32
  }
  func.func @transform_3(%arg0: i32, %arg1: memref<2xf32, #tpu.memory_space<smem>>) -> (i32, i32) {
    %c0_i32 = arith.constant 0 : i32
    %c0_i32_0 = arith.constant 0 : i32
    return %arg0, %c0_i32 : i32, i32
  }
}

</mosaic_0001>

<llo_original>
// kernel: tpu_custom_call.1
$region0: #{tpu_custom_call.1}
  #allocation0 [shape = 'u32[]', space=smem, size = 0x4, offset = 0x4, fixed_abs, tag = 'smem constant byte address 0x4 - core index']
  #allocation1 [shape = 'u32[144,128]{1,0:T(1,128)}', space=vmem, size = 0x12000, scoped, tag = 'internal scratch']
  #allocation2 [shape = 's32[1]{0}', space=sflag, size = 0x4, scoped, tag = 'scoped memory for tpu_custom_call.1']
  #allocation3 [shape = 'u8[512]{0}', space=smem, size = 0x200, scoped, tag = 'prefetched SMEM operand 0']
  %s0 = inlined_call_operand.hbm [shape: f32[2], index: 0, kind: input, shape index: {}]
  %s1 = inlined_call_operand.hbm [shape: f32[8,256], index: 1, kind: input, shape index: {}]
  %s2 = inlined_call_operand.hbm [shape: f32[8,256], index: 2, kind: input, shape index: {}]
  %s3 = inlined_call_operand.hbm [shape: f32[8,256], index: 3, kind: input, shape index: {}]
  %s4 = inlined_call_operand.hbm [shape: f32[8,256], index: 4, kind: output, shape index: {}]
  %s5 = sld [smem:[#allocation0]]
  $region34: #{tpu_custom_call.1} parent=0
    _
  %s7 = ssub.s32 1, %s5
  %s8 = scalar_select 0, %s7, %s5
  %10 = dma.hbm_to_smem %s0, 16, [#allocation3], [#allocation2]
  %11 = dma.done [#allocation2], 16
  %12 = sfence
  $region1: #{tpu_custom_call.1} parent=0
    #allocation4 [shape = 'u8[8192]{0}', space=vmem, size = 0x2000, scoped, tag = 'input window, operand 1, single buffered']
    #allocation5 [shape = 's32[1]{0}', space=sflag, size = 0x4, scoped, tag = 'scoped memory for tpu_custom_call.1']
    #allocation6 [shape = 's32[1]{0}', space=sflag, size = 0x4, scoped, tag = 'scoped memory for tpu_custom_call.1']
    #allocation7 [shape = 'u8[8192]{0}', space=vmem, size = 0x2000, scoped, tag = 'input window, operand 2, single buffered']
    #allocation8 [shape = 's32[1]{0}', space=sflag, size = 0x4, scoped, tag = 'scoped memory for tpu_custom_call.1']
    #allocation9 [shape = 'u8[8192]{0}', space=vmem, size = 0x2000, scoped, tag = 'input window, operand 3, single buffered']
    #allocation10 [shape = 'u8[8192]{0}', space=vmem, size = 0x2000, scoped, tag = 'output window, operand 0, single buffered']
    %13 = vsyncpa [#allocation5], 0
    %14 = vsyncpa [#allocation8], 0
    %15 = vsyncpa [#allocation6], 0
    // Predicated region
    $region2: #{tpu_custom_call.1} parent=1 // pred_check
      _
    $region3: #{tpu_custom_call.1} parent=1 // pred_check_branch
      %17 = sbr.rel (0) target = $region5
    $region4: #{tpu_custom_call.1} parent=1 // pred_region
      %s19 = ssub.s32 256, 256
      %20 = vsyncadd [#allocation5], %s19
      %s22 = sshll.u32 [#allocation4], 4
      %s23 = int_to_ptr.vmem [resolvable:$true] %s22
      %25 = dma.hbm_to_vmem [thread:$0]  %s1, 256, %s23, [#allocation5]
    $region5: #{tpu_custom_call.1} parent=1 // pred_fallthru
      _
    // Predicated region
    $region6: #{tpu_custom_call.1} parent=1 // pred_check
      _
    $region7: #{tpu_custom_call.1} parent=1 // pred_check_branch
      %27 = sbr.rel (0) target = $region9
    $region8: #{tpu_custom_call.1} parent=1 // pred_region
      %s29 = ssub.s32 256, 256
      %30 = vsyncadd [#allocation8], %s29
      %s32 = sshll.u32 [#allocation7], 4
      %s33 = int_to_ptr.vmem [resolvable:$true] %s32
      %35 = dma.hbm_to_vmem [thread:$0]  %s2, 256, %s33, [#allocation8]
    $region9: #{tpu_custom_call.1} parent=1 // pred_fallthru
      _
    // Predicated region
    $region10: #{tpu_custom_call.1} parent=1 // pred_check
      _
    $region11: #{tpu_custom_call.1} parent=1 // pred_check_branch
      %37 = sbr.rel (0) target = $region13
    $region12: #{tpu_custom_call.1} parent=1 // pred_region
      %s39 = ssub.s32 256, 256
      %40 = vsyncadd [#allocation8], %s39
      %s42 = sshll.u32 [#allocation9], 4
      %s43 = int_to_ptr.vmem [resolvable:$true] %s42
      %45 = dma.hbm_to_vmem [thread:$0]  %s3, 256, %s43, [#allocation8]
    $region13: #{tpu_custom_call.1} parent=1 // pred_fallthru
      _
    // Predicated region
    $region14: #{tpu_custom_call.1} parent=1 // pred_check
      _
    $region15: #{tpu_custom_call.1} parent=1 // pred_check_branch
      %47 = sbr.rel (0) target = $region17
    $region16: #{tpu_custom_call.1} parent=1 // pred_region
      %48 = dma.done [#allocation5], 256
    $region17: #{tpu_custom_call.1} parent=1 // pred_fallthru
      _
    // Predicated region
    $region18: #{tpu_custom_call.1} parent=1 // pred_check
      _
    $region19: #{tpu_custom_call.1} parent=1 // pred_check_branch
      %50 = sbr.rel (0) target = $region21
    $region20: #{tpu_custom_call.1} parent=1 // pred_region
      %51 = dma.done [#allocation8], 256
    $region21: #{tpu_custom_call.1} parent=1 // pred_fallthru
      _
    // Predicated region
    $region22: #{tpu_custom_call.1} parent=1 // pred_check
      _
    $region23: #{tpu_custom_call.1} parent=1 // pred_check_branch
      %53 = sbr.rel (0) target = $region25
    $region24: #{tpu_custom_call.1} parent=1 // pred_region
      %54 = dma.done [#allocation8], 256
    $region25: #{tpu_custom_call.1} parent=1 // pred_fallthru
      _
    %v55 = vld [vmem:[#allocation4] sm:$0xff]
    %v56 = vld [vmem:[#allocation4 + $0x8] sm:$0xff]
    %v57 = vld [vmem:[#allocation7] sm:$0xff]
    %v58 = vld [vmem:[#allocation7 + $0x8] sm:$0xff]
    %s59 = sld [smem:[#allocation3]]
    %v60 = vstv %s59
    %v61 = vmul.f32 %v57, %v60
    %v62 = vmul.f32 %v58, %v60
    %v63 = vadd.f32 %v55, %v61
    %v64 = vadd.f32 %v56, %v62
    %v65 = vld [vmem:[#allocation9] sm:$0xff]
    %v66 = vld [vmem:[#allocation9 + $0x8] sm:$0xff]
    %s67 = sld [smem:[#allocation3 + $0x1]]
    %v68 = vstv %s67
    %v69 = vmul.f32 %v65, %v68
    %v70 = vmul.f32 %v66, %v68
    %v71 = vadd.f32 %v63, %v69
    %v72 = vadd.f32 %v64, %v70
    %73 = vst [vmem:[#allocation10] sm:$0xff] %v71
    %74 = vst [vmem:[#allocation10 + $0x8] sm:$0xff] %v72
    // Predicated region
    $region26: #{tpu_custom_call.1} parent=1 // pred_check
      _
    $region27: #{tpu_custom_call.1} parent=1 // pred_check_branch
      %76 = sbr.rel (0) target = $region29
    $region28: #{tpu_custom_call.1} parent=1 // pred_region
      %s78 = ssub.s32 256, 256
      %79 = vsyncadd [#allocation6], %s78
      %s81 = sshll.u32 [#allocation10], 4
      %s82 = int_to_ptr.vmem [resolvable:$true] %s81
      %84 = dma.vmem_to_hbm [thread:$0]  %s82, 256, %s4, [#allocation6]
    $region29: #{tpu_custom_call.1} parent=1 // pred_fallthru
      _
    // Predicated region
    $region30: #{tpu_custom_call.1} parent=1 // pred_check
      _
    $region31: #{tpu_custom_call.1} parent=1 // pred_check_branch
      %86 = sbr.rel (0) target = $region33
    $region32: #{tpu_custom_call.1} parent=1 // pred_region
      %87 = dma.done [#allocation6], 256
    $region33: #{tpu_custom_call.1} parent=1 // pred_fallthru
      _
    %88 = vsyncpa [#allocation5], 1
    %89 = vsyncpa [#allocation8], 1
    %90 = vsyncpa [#allocation6], 1

</llo_original>
